<compile_context>
chip_gen: v6e
topology: v6e:2x2x1
jax: 0.10.0
libtpu: 0.0.40
codegen_flags: <defaults>
</compile_context>

<pallas_src>
import re

import jax
import jax.numpy as jnp
from jax.experimental import pallas as pl
from jax.experimental.pallas import tpu as pltpu

LANES = 128        # vreg lane width
SUBLANES = 8       # vreg sublane count (f32)


def _tpu_generation() -> int:
    """Best-effort TPU generation from device_kind; 0 if unknown."""
    try:
        kind = jax.devices()[0].device_kind.lower()
        m = re.search(r"(\d+)", kind)
        return int(m.group(1)) if m else 0
    except Exception:  # pragma: no cover - conservative fallback
        return 0


def _make_smape_kernel(n_rows_valid: int, tm: int, tiles_per_chunk: int,
                       n_acc: int, needs_mask: bool, approx_recip: bool):
    rows_per_acc = tm // (SUBLANES * n_acc)

    def _partial(term):
        # VPU-only partial reduction into n_acc independent vreg-shaped
        # accumulators (breaks the serial add chain).
        return jnp.sum(
            term.reshape(rows_per_acc, n_acc, SUBLANES, LANES), axis=0)

    def smape_kernel(pred_ref, true_ref, out_ref, acc_ref):
        i = pl.program_id(1)

        @pl.when(i == 0)
        def _init():
            acc_ref[...] = jnp.zeros_like(acc_ref)

        p = pred_ref[...].astype(jnp.float32)
        t = true_ref[...].astype(jnp.float32)

        num = jnp.abs(p - t)
        den = jnp.abs(p) + jnp.abs(t)
        if approx_recip:
            # v7x: move the division to the (otherwise idle) EUP slot so the
            # VALU slot doesn't become the binding unit.
            term = num * pl.reciprocal(den, approx=True)
        else:
            # v5e/v6e: exact f32 divide (torch-identical), free under HBM slack.
            term = num / den

        if needs_mask:
            tile_idx = pl.program_id(0) * tiles_per_chunk + i
            row0 = tile_idx * tm
            is_tail = row0 + tm > n_rows_valid

            @pl.when(is_tail)
            def _masked_accum():
                # Only the tail / duplicate tile pays for the iota + select.
                rid = row0 + jax.lax.broadcasted_iota(
                    jnp.int32, (tm, LANES), 0)
                acc_ref[...] += _partial(
                    jnp.where(rid < n_rows_valid, term, 0.0))

            @pl.when(jnp.logical_not(is_tail))
            def _plain_accum():
                acc_ref[...] += _partial(term)
        else:
            acc_ref[...] += _partial(term)

        @pl.when(i == pl.num_programs(1) - 1)
        def _finalize():
            out_ref[0] = jnp.sum(acc_ref[...], axis=0)

    return smape_kernel


def smape(pred: jax.Array, true: jax.Array, *, tm_max: int | None = None) -> jax.Array:
    assert pred.shape == true.shape, (
        f"pred.shape={pred.shape}   true.shape={true.shape}"
    )
    n_valid = pred.size

    gen = _tpu_generation()
    if tm_max is None:
        # 8192 rows -> 4 MiB/input/buffer -> 16 MiB blocked VMEM (v6e/v7x,
        # 32 MiB scoped default).  4096 -> 8 MiB on v5e (16 MiB default).
        tm_max = 8192 if gen >= 6 else 4096
    approx_recip = gen >= 7          # v7x only
    max_chunks = 2 if gen >= 7 else 1  # megacore split only on multi-TC chips

    p = pred.reshape(-1)
    t = true.reshape(-1)

    # Pad only when numel is not a multiple of 8*128 (tiny tail; pad value 1.0
    # makes each padded term exactly 0).  Common NCHW sizes need no pad.
    granule = SUBLANES * LANES
    n_padded = pl.cdiv(n_valid, granule) * granule
    if n_padded != n_valid:
        pad = n_padded - n_valid
        p = jnp.pad(p, (0, pad), constant_values=1.0)
        t = jnp.pad(t, (0, pad), constant_values=1.0)

    rows = n_padded // LANES
    p2d = p.reshape(rows, LANES)      # lane-dense (rows, 128) slab
    t2d = t.reshape(rows, LANES)

    tm = min(tm_max, rows)            # rows and tm are multiples of 8
    num_tiles = pl.cdiv(rows, tm)
    n_chunks = max_chunks if num_tiles >= max_chunks else 1
    tiles_per_chunk = pl.cdiv(num_tiles, n_chunks)
    has_dup = (n_chunks * tiles_per_chunk != num_tiles)
    needs_mask = (rows % tm != 0) or has_dup

    # Independent accumulators: largest of {4,2,1} dividing tm//8.
    if tm % (SUBLANES * 4) == 0:
        n_acc = 4
    elif tm % (SUBLANES * 2) == 0:
        n_acc = 2
    else:
        n_acc = 1

    if has_dup:
        # Clamp so the extra tile of an odd split re-reads the last valid tile
        # (fully masked in-kernel) instead of indexing past the array.
        def in_map(c, i):
            return (jnp.minimum(c * tiles_per_chunk + i, num_tiles - 1), 0)
    else:
        def in_map(c, i):
            return (c * tiles_per_chunk + i, 0)

    partials = pl.pallas_call(
        _make_smape_kernel(rows, tm, tiles_per_chunk, n_acc, needs_mask,
                           approx_recip),
        out_shape=jax.ShapeDtypeStruct((n_chunks, SUBLANES, LANES),
                                       jnp.float32),
        grid_spec=pltpu.PrefetchScalarGridSpec(
            num_scalar_prefetch=0,
            grid=(n_chunks, tiles_per_chunk),
            in_specs=[
                pl.BlockSpec((tm, LANES), in_map),
                pl.BlockSpec((tm, LANES), in_map),
            ],
            out_specs=pl.BlockSpec((1, SUBLANES, LANES),
                                   lambda c, i: (c, 0, 0)),
            scratch_shapes=[pltpu.VMEM((n_acc, SUBLANES, LANES), jnp.float32)],
        ),
        compiler_params=pltpu.CompilerParams(
            dimension_semantics=("parallel", "arbitrary"),
        ),
    )(p2d, t2d)

    # Single tiny cross-lane reduction; the x2 scale is exact in f32 and
    # cheaper here than per element in the hot loop.
    return 2.0 * jnp.sum(partials) / jnp.float32(n_valid)


if __name__ == "__main__":
    key = jax.random.PRNGKey(0)
    k1, k2, k3, k4 = jax.random.split(key, 4)

    # Primary check: NCHW-like prediction / target pair (exact-tiling path,
    # no pad, no mask).
    pred = jax.random.normal(k1, (2, 4, 16, 16), dtype=jnp.float32)
    true = jax.random.normal(k2, (2, 4, 16, 16), dtype=jnp.float32)
    result = jax.block_until_ready(smape(pred, true))
    ref = jnp.mean(2.0 * jnp.abs(pred - true) / (jnp.abs(pred) + jnp.abs(true)))
    assert jnp.allclose(result, ref, rtol=1e-5, atol=1e-6), (result, ref)

    # Secondary check: ragged size + small tile to exercise the tail pad,
    # the hoisted in-kernel row mask, and the multi-tile reduction axis.
    pred2 = jax.random.normal(k3, (2, 4, 33, 33), dtype=jnp.float32)
    true2 = jax.random.normal(k4, (2, 4, 33, 33), dtype=jnp.float32)
    result2 = jax.block_until_ready(smape(pred2, true2, tm_max=64))
    ref2 = jnp.mean(2.0 * jnp.abs(pred2 - true2) /
                    (jnp.abs(pred2) + jnp.abs(true2)))
    # Looser tolerance on v7x (approx reciprocal path); exact elsewhere.
    tol = 1e-3 if _tpu_generation() >= 7 else 1e-5
    assert jnp.allclose(result2, ref2, rtol=tol, atol=1e-6), (result2, ref2)

    print("KERNEL_OK")
</pallas_src>

<mosaic_0001>
module attributes {stable_mosaic.version = 11 : i64} {
  func.func @smape_kernel(%arg0: i32, %arg1: i32, %arg2: memref<16x128xf32, #tpu.memory_space<vmem>>, %arg3: memref<16x128xf32, #tpu.memory_space<vmem>>, %arg4: memref<1x8x128xf32, #tpu.memory_space<vmem>>, %arg5: memref<2x8x128xf32, #tpu.memory_space<vmem>>) attributes {dimension_semantics = [#tpu.dimension_semantics<parallel>, #tpu.dimension_semantics<arbitrary>], iteration_bounds = array<i64: 1, 1>, scalar_prefetch = 0 : i64, scratch_operands = 1 : i64, tpu.core_type = #tpu.core_type<tc>, window_params = [{transform_indices = @transform_0, window_bounds = array<i64: 16, 128>}, {transform_indices = @transform_1, window_bounds = array<i64: 16, 128>}, {transform_indices = @transform_2, window_bounds = array<i64: 1, 8, 128>}]} {
    %c0_i32 = arith.constant 0 : i32
    %0 = arith.cmpi eq, %arg1, %c0_i32 : i32
    %1 = arith.extui %0 : i1 to i32
    %c0_i32_0 = arith.constant 0 : i32
    %2 = arith.cmpi ne, %1, %c0_i32_0 : i32
    scf.if %2 {
      %cst_12 = arith.constant 0.000000e+00 : f32
      %19 = vector.broadcast %cst_12 : f32 to vector<2x8x128xf32>
      %c0_13 = arith.constant 0 : index
      %c0_14 = arith.constant 0 : index
      %c0_15 = arith.constant 0 : index
      %20 = vector.load %arg5[%c0_13, %c0_14, %c0_15] : memref<2x8x128xf32, #tpu.memory_space<vmem>>, vector<2x8x128xf32>
      tpu.vector_store %arg5[%c0_13, %c0_14, %c0_15], %19 {strides = array<i32>} : memref<2x8x128xf32, #tpu.memory_space<vmem>>, vector<2x8x128xf32>,
    } else {
    }
    %c0 = arith.constant 0 : index
    %c0_1 = arith.constant 0 : index
    %3 = vector.load %arg2[%c0, %c0_1] : memref<16x128xf32, #tpu.memory_space<vmem>>, vector<16x128xf32>
    %c0_2 = arith.constant 0 : index
    %c0_3 = arith.constant 0 : index
    %4 = vector.load %arg3[%c0_2, %c0_3] : memref<16x128xf32, #tpu.memory_space<vmem>>, vector<16x128xf32>
    %5 = arith.subf %3, %4 : vector<16x128xf32>
    %6 = math.absf %5 : vector<16x128xf32>
    %7 = math.absf %3 : vector<16x128xf32>
    %8 = math.absf %4 : vector<16x128xf32>
    %9 = arith.addf %7, %8 : vector<16x128xf32>
    %10 = arith.divf %6, %9 : vector<16x128xf32>
    %c0_4 = arith.constant 0 : index
    %c0_5 = arith.constant 0 : index
    %c0_6 = arith.constant 0 : index
    %11 = vector.load %arg5[%c0_4, %c0_5, %c0_6] : memref<2x8x128xf32, #tpu.memory_space<vmem>>, vector<2x8x128xf32>
    %12 = vector.shape_cast %10 : vector<16x128xf32> to vector<1x2x8x128xf32>
    %cst = arith.constant dense<0.000000e+00> : vector<2x8x128xf32>
    %13 = vector.multi_reduction <add>, %12, %cst [0] : vector<1x2x8x128xf32> to vector<2x8x128xf32>
    %14 = arith.addf %11, %13 : vector<2x8x128xf32>
    %c0_7 = arith.constant 0 : index
    %c0_8 = arith.constant 0 : index
    %c0_9 = arith.constant 0 : index
    %15 = vector.load %arg5[%c0_7, %c0_8, %c0_9] : memref<2x8x128xf32, #tpu.memory_space<vmem>>, vector<2x8x128xf32>
    tpu.vector_store %arg5[%c0_7, %c0_8, %c0_9], %14 {strides = array<i32>} : memref<2x8x128xf32, #tpu.memory_space<vmem>>, vector<2x8x128xf32>,
    %c0_i32_10 = arith.constant 0 : i32
    %16 = arith.cmpi eq, %arg1, %c0_i32_10 : i32
    %17 = arith.extui %16 : i1 to i32
    %c0_i32_11 = arith.constant 0 : i32
    %18 = arith.cmpi ne, %17, %c0_i32_11 : i32
    scf.if %18 {
      %c0_12 = arith.constant 0 : index
      %c0_13 = arith.constant 0 : index
      %c0_14 = arith.constant 0 : index
      %19 = vector.load %arg5[%c0_12, %c0_13, %c0_14] : memref<2x8x128xf32, #tpu.memory_space<vmem>>, vector<2x8x128xf32>
      %cst_15 = arith.constant dense<0.000000e+00> : vector<8x128xf32>
      %20 = vector.multi_reduction <add>, %19, %cst_15 [0] : vector<2x8x128xf32> to vector<8x128xf32>
      %c0_16 = arith.constant 0 : index
      %c0_17 = arith.constant 0 : index
      %c0_18 = arith.constant 0 : index
      %21 = vector.load %arg4[%c0_16, %c0_17, %c0_18] : memref<1x8x128xf32, #tpu.memory_space<vmem>>, vector<1x8x128xf32>
      %22 = vector.shape_cast %21 : vector<1x8x128xf32> to vector<8x128xf32>
      %23 = vector.shape_cast %20 : vector<8x128xf32> to vector<1x8x128xf32>
      tpu.vector_store %arg4[%c0_16, %c0_17, %c0_18], %23 {strides = array<i32>} : memref<1x8x128xf32, #tpu.memory_space<vmem>>, vector<1x8x128xf32>,
    } else {
    }
    return
  }
  func.func @transform_0(%arg0: i32, %arg1: i32) -> (i32, i32) {
    %c1_i32 = arith.constant 1 : i32
    %0 = arith.muli %arg0, %c1_i32 : i32
    %1 = arith.addi %0, %arg1 : i32
    %c0_i32 = arith.constant 0 : i32
    %c0_i32_0 = arith.constant 0 : i32
    return %1, %c0_i32 : i32, i32
  }
  func.func @transform_1(%arg0: i32, %arg1: i32) -> (i32, i32) {
    %c1_i32 = arith.constant 1 : i32
    %0 = arith.muli %arg0, %c1_i32 : i32
    %1 = arith.addi %0, %arg1 : i32
    %c0_i32 = arith.constant 0 : i32
    %c0_i32_0 = arith.constant 0 : i32
    return %1, %c0_i32 : i32, i32
  }
  func.func @transform_2(%arg0: i32, %arg1: i32) -> (i32, i32, i32) {
    %c0_i32 = arith.constant 0 : i32
    %c0_i32_0 = arith.constant 0 : i32
    %c0_i32_1 = arith.constant 0 : i32
    return %arg0, %c0_i32, %c0_i32_0 : i32, i32, i32
  }
}

</mosaic_0001>

<llo_original>
// kernel: tpu_custom_call.1
$region0: #{tpu_custom_call.1}
  #allocation0 [shape = 'u32[]', space=smem, size = 0x4, offset = 0x4, fixed_abs, tag = 'smem constant byte address 0x4 - core index']
  #allocation1 [shape = 'u32[144,128]{1,0:T(1,128)}', space=vmem, size = 0x12000, scoped, tag = 'internal scratch']
  #allocation2 [shape = 'f32[2,8,128]{2,1,0:T(8,128)}', space=vmem, size = 0x2000, scoped, tag = 'scratch operand']
  %s0 = inlined_call_operand.hbm [shape: f32[16,128], index: 0, kind: input, shape index: {}]
  %s1 = inlined_call_operand.hbm [shape: f32[16,128], index: 1, kind: input, shape index: {}]
  %s2 = inlined_call_operand.hbm [shape: f32[1,8,128], index: 2, kind: output, shape index: {}]
  %s3 = sld [smem:[#allocation0]]
  $region34: #{tpu_custom_call.1} parent=0
    _
  %s5 = ssub.s32 1, %s3
  %s6 = scalar_select 0, %s5, %s3
  $region1: #{tpu_custom_call.1} parent=0
    #allocation3 [shape = 'u8[8192]{0}', space=vmem, size = 0x2000, scoped, tag = 'input window, operand 0, single buffered']
    #allocation4 [shape = 's32[1]{0}', space=sflag, size = 0x4, scoped, tag = 'scoped memory for tpu_custom_call.1']
    #allocation5 [shape = 's32[1]{0}', space=sflag, size = 0x4, scoped, tag = 'scoped memory for tpu_custom_call.1']
    #allocation6 [shape = 'u8[8192]{0}', space=vmem, size = 0x2000, scoped, tag = 'input window, operand 1, single buffered']
    #allocation7 [shape = 's32[1]{0}', space=sflag, size = 0x4, scoped, tag = 'scoped memory for tpu_custom_call.1']
    #allocation8 [shape = 'u8[4096]{0}', space=vmem, size = 0x1000, scoped, tag = 'output window, operand 0, single buffered']
    %7 = vsyncpa [#allocation4], 0
    %8 = vsyncpa [#allocation7], 0
    %9 = vsyncpa [#allocation5], 0
    // Predicated region
    $region2: #{tpu_custom_call.1} parent=1 // pred_check
      _
    $region3: #{tpu_custom_call.1} parent=1 // pred_check_branch
      %11 = sbr.rel (0) target = $region5
    $region4: #{tpu_custom_call.1} parent=1 // pred_region
      %s12 = sadd.s32 0, 0
      %s13 = smul.u32 2, %s12
      %s15 = ssub.s32 256, 256
      %16 = vsyncadd [#allocation4], %s15
      %s17 = smul.addr %s13, 128
      %s18 = scalar_lea.hbm %s0, %s17
      %s19 = sshll.u32 [#allocation3], 4
      %s20 = int_to_ptr.vmem [resolvable:$true] %s19
      %25 = dma.hbm_to_vmem [thread:$0]  %s18, 256, %s20, [#allocation4], 128, 128, 8
    $region5: #{tpu_custom_call.1} parent=1 // pred_fallthru
      _
    // Predicated region
    $region6: #{tpu_custom_call.1} parent=1 // pred_check
      _
    $region7: #{tpu_custom_call.1} parent=1 // pred_check_branch
      %27 = sbr.rel (0) target = $region9
    $region8: #{tpu_custom_call.1} parent=1 // pred_region
      %s28 = sadd.s32 0, 0
      %s29 = smul.u32 2, %s28
      %s31 = ssub.s32 256, 256
      %32 = vsyncadd [#allocation7], %s31
      %s33 = smul.addr %s29, 128
      %s34 = scalar_lea.hbm %s1, %s33
      %s35 = sshll.u32 [#allocation6], 4
      %s36 = int_to_ptr.vmem [resolvable:$true] %s35
      %41 = dma.hbm_to_vmem [thread:$0]  %s34, 256, %s36, [#allocation7], 128, 128, 8
    $region9: #{tpu_custom_call.1} parent=1 // pred_fallthru
      _
    // Predicated region
    $region10: #{tpu_custom_call.1} parent=1 // pred_check
      _
    $region11: #{tpu_custom_call.1} parent=1 // pred_check_branch
      %43 = sbr.rel (0) target = $region13
    $region12: #{tpu_custom_call.1} parent=1 // pred_region
      %44 = dma.done [#allocation4], 256
    $region13: #{tpu_custom_call.1} parent=1 // pred_fallthru
      _
    // Predicated region
    $region14: #{tpu_custom_call.1} parent=1 // pred_check
      _
    $region15: #{tpu_custom_call.1} parent=1 // pred_check_branch
      %46 = sbr.rel (0) target = $region17
    $region16: #{tpu_custom_call.1} parent=1 // pred_region
      %47 = dma.done [#allocation7], 256
    $region17: #{tpu_custom_call.1} parent=1 // pred_fallthru
      _
    %s48 = sadd.s32 0, 0
    %s49 = smul.u32 2, %s48
    %s50 = sadd.s32 0, 0
    %s51 = smul.u32 2, %s50
    %p52 = scmp.eq.s32.totalorder 0, 0
    // Predicated region
    $region18: #{tpu_custom_call.1} parent=1 // pred_check
      %p53 = pneg %p52
    $region19: #{tpu_custom_call.1} parent=1 // pred_check_branch
      %55 = sbr.rel (%p53) target = $region21
    $region20: #{tpu_custom_call.1} parent=1 // pred_region
      %56 = vst [vmem:[#allocation2] sm:$0xff] 0.0
      %57 = vst [vmem:[#allocation2 + $0x8] sm:$0xff] 0.0
    $region21: #{tpu_custom_call.1} parent=1 // pred_fallthru
      _
    %v58 = vld [vmem:[#allocation3] sm:$0xff]
    %v59 = vld [vmem:[#allocation3 + $0x8] sm:$0xff]
    %v60 = vld [vmem:[#allocation6] sm:$0xff]
    %v61 = vld [vmem:[#allocation6 + $0x8] sm:$0xff]
    %v62 = vsub.f32 %v58, %v60
    %v63 = vsub.f32 %v59, %v61
    %v64 = vand.u32 2147483647, %v62
    %v65 = vand.u32 2147483647, %v63
    %v66 = vand.u32 2147483647, %v58
    %v67 = vand.u32 2147483647, %v59
    %v68 = vand.u32 2147483647, %v60
    %v69 = vand.u32 2147483647, %v61
    %v70 = vadd.f32 %v66, %v68
    %v71 = vadd.f32 %v67, %v69
    %v72 = vrcp.pop %v70
    %v73 = vmul.f32 %v64, %v72
    %v74 = vrcp.pop %v71
    %v75 = vmul.f32 %v65, %v74
    %v76 = vld [vmem:[#allocation2] sm:$0xff]
    %v77 = vld [vmem:[#allocation2 + $0x8] sm:$0xff]
    %v78 = vadd.f32 %v73, 0.0
    %v79 = vadd.f32 %v75, 0.0
    %v80 = vadd.f32 %v76, %v78
    %v81 = vadd.f32 %v77, %v79
    %82 = vst [vmem:[#allocation2] sm:$0xff] %v80
    %83 = vst [vmem:[#allocation2 + $0x8] sm:$0xff] %v81
    // Predicated region
    $region22: #{tpu_custom_call.1} parent=1 // pred_check
      %p84 = pneg %p52
    $region23: #{tpu_custom_call.1} parent=1 // pred_check_branch
      %86 = sbr.rel (%p84) target = $region25
    $region24: #{tpu_custom_call.1} parent=1 // pred_region
      %v87 = vld [vmem:[#allocation2] sm:$0xff]
      %v88 = vld [vmem:[#allocation2 + $0x8] sm:$0xff]
      %v89 = vadd.f32 %v87, %v88
      %90 = vst [vmem:[#allocation8] sm:$0xff] %v89
    $region25: #{tpu_custom_call.1} parent=1 // pred_fallthru
      _
    // Predicated region
    $region26: #{tpu_custom_call.1} parent=1 // pred_check
      _
    $region27: #{tpu_custom_call.1} parent=1 // pred_check_branch
      %92 = sbr.rel (0) target = $region29
    $region28: #{tpu_custom_call.1} parent=1 // pred_region
      %s94 = ssub.s32 128, 128
      %95 = vsyncadd [#allocation5], %s94
      %s97 = sshll.u32 [#allocation8], 4
      %s98 = int_to_ptr.vmem [resolvable:$true] %s97
      %100 = dma.vmem_to_hbm [thread:$0]  %s98, 128, %s2, [#allocation5]
    $region29: #{tpu_custom_call.1} parent=1 // pred_fallthru
      _
    // Predicated region
    $region30: #{tpu_custom_call.1} parent=1 // pred_check
      _
    $region31: #{tpu_custom_call.1} parent=1 // pred_check_branch
      %102 = sbr.rel (0) target = $region33
    $region32: #{tpu_custom_call.1} parent=1 // pred_region
      %103 = dma.done [#allocation5], 128
    $region33: #{tpu_custom_call.1} parent=1 // pred_fallthru
      _
    %104 = vsyncpa [#allocation4], 1
    %105 = vsyncpa [#allocation7], 1
    %106 = vsyncpa [#allocation5], 1

</llo_original>
